<compile_context>
chip_gen: v7x
topology: tpu7x:2x2x1
jax: 0.10.0
libtpu: 0.0.40
codegen_flags: <defaults>
</compile_context>

<pallas_src>
import functools

import jax
import jax.numpy as jnp
from jax import lax
from jax.experimental import pallas as pl
from jax.experimental.pallas import tpu as pltpu


_MATMUL_DTYPE = jnp.bfloat16


def _vmem_budgets():
    """(per-call tile budget, scoped vmem limit) derived from the chip."""
    try:
        cap = int(pltpu.get_tpu_info().vmem_capacity_bytes)
        if cap <= 0:
            raise ValueError("bad vmem capacity")
    except Exception:
        cap = 64 * 1024 * 1024            # conservative fallback (v7x: 64 MiB/TC)
    tile_budget = max(4 * 1024 * 1024, cap // 5)       # ~12.8 MiB v7x, ~25 MiB v5e/v6e
    vmem_limit = max(32 * 1024 * 1024, int(cap * 0.78))  # ~50 MiB v7x, ~100 MiB v5e/v6e
    return tile_budget, vmem_limit


def _gram_kernel(x_ref, gram_ref, sum_ref):
    # x_ref: (1, Cin, THW) bf16 (zero-padded columns contribute exactly 0).
    # Accumulates per-batch  G = x @ x^T  (Cin,Cin)  and  s = rowsum(x) (Cin,1).
    @pl.when(pl.program_id(1) == 0)
    def _():
        gram_ref[...] = jnp.zeros_like(gram_ref)
        sum_ref[...] = jnp.zeros_like(sum_ref)

    x = x_ref[0]                                               # (Cin, THW) bf16
    g = lax.dot_general(x, x, (((1,), (1,)), ((), ())),        # x @ x^T, K=THW
                        preferred_element_type=jnp.float32)
    s = jnp.sum(x.astype(jnp.float32), axis=1, keepdims=True)  # (Cin, 1)
    gram_ref[0] += g
    sum_ref[0] += s


def _apply_kernel(x_ref, w_ref, scale_ref, shift_ref, o_ref, *, activation):
    # Recompute the cheap (K=Cin) matmul and fuse BN affine + activation.
    # NOTE: for Cin < 256 the MXU K dim is underfilled on v6e/v7x; it is
    # hidden under the HBM-write bound — widen THW, do not stack Cin.
    x = x_ref[0]                                               # (Cin, THW) bf16
    w = w_ref[...]                                             # (Cs2, Cin) bf16
    y = jnp.dot(w, x, preferred_element_type=jnp.float32)      # (Cs2, THW) f32
    out = y * scale_ref[...] + shift_ref[...]                  # broadcast over lanes
    if activation == "sigmoid":
        # EUP exp + approx reciprocal (EUP slots) instead of a VPU divide.
        out = pl.reciprocal(1.0 + jnp.exp(-out), approx=True)
    else:
        out = jnp.maximum(out, 0.0)
    o_ref[0] = out.astype(o_ref.dtype)


def _pick_hw_tile(hw_pad, max_thw, n_batch):
    """Largest lane-dense tile dividing hw_pad; prefer an even total grid."""
    cands = [t for t in range(128, min(hw_pad, max_thw) + 1, 128)
             if hw_pad % t == 0]
    if not cands:
        return 128
    best = max(cands)
    even = [t for t in cands
            if (n_batch * (hw_pad // t)) % 2 == 0 and 2 * t >= best]
    return max(even) if even else best


def decode_block(x, conv_w, conv_b, gamma, beta, *, stride, eps=1e-5,
                 activation="relu", out_dtype=jnp.bfloat16, layout="nchw"):
    """x: (N, Cin, H, W) NCHW.  conv_w: (Cin, Cout, k, k) with k == stride.

    layout="nchw"   -> (N, Cout, H*k, W*k)   (module semantics, default)
    layout="packed" -> (N, Cout*k*k, H*W)    kernel-native; row c*k*k+kh*k+kw,
                        column h*W+w maps to spatial (h*k+kh, w*k+kw).  Skips
                        the pixel-shuffle transpose (one full extra HBM pass).
    """
    n, cin, h, w = x.shape
    cin_w, cout, k, k2 = conv_w.shape
    assert k == stride and k2 == stride and cin_w == cin
    s2 = k * k
    hw = h * w
    cs2 = cout * s2
    out_bytes = jnp.dtype(out_dtype).itemsize

    # Layout prep: pure reshape of x (no transpose) + zero-pad HW to a
    # lane-dense multiple of 128.  Zero columns add exactly 0 to the Gram
    # statistics and the BN count below uses the true H*W.
    hw_pad = ((hw + 127) // 128) * 128
    x3 = x.reshape(n, cin, hw).astype(_MATMUL_DTYPE)             # (N, Cin, HW)
    if hw_pad != hw:
        x3 = jnp.pad(x3, ((0, 0), (0, 0), (0, hw_pad - hw)))
    w_t = conv_w.reshape(cin, cs2).T.astype(_MATMUL_DTYPE)       # (Cs2, Cin)
    # TODO(synk): re-add conv_b if this block is ever run with eval-mode
    # (running) BatchNorm stats; with train-mode BN it cancels exactly.
    del conv_b

    # Generation-aware tiling (v7x: 64 MiB VMEM/TC, v5e/v6e: 128 MiB).
    tile_budget, vmem_limit = _vmem_budgets()
    fixed = 2 * cs2 * cin * 2 + 2 * 2 * cs2 * 4       # dbl-buffered W_t, scale, shift
    per_thw = (2 * 2 * cin                            # dbl-buffered x (bf16)
               + max(2 * cs2 * out_bytes + 4 * cs2,   # dbl-buffered out + f32 y
                     8 * cin))                        # phase-1 f32 copy of x
    max_thw = max(128, ((tile_budget - fixed) // per_thw) // 128 * 128)
    thw = _pick_hw_tile(hw_pad, max_thw, n)
    n_hw = hw_pad // thw
    grid = (n, n_hw)

    x_spec = pl.BlockSpec((1, cin, thw), lambda b, t: (b, 0, t))
    w_spec = pl.BlockSpec((cs2, cin), lambda b, t: (0, 0))        # VMEM-resident

    # ---- phase 1: per-batch Gram + row sums, accumulated in VMEM ----
    gram_part, sum_part = pl.pallas_call(
        _gram_kernel,
        grid=grid,
        in_specs=[x_spec],
        out_specs=[pl.BlockSpec((1, cin, cin), lambda b, t: (b, 0, 0)),
                   pl.BlockSpec((1, cin, 1), lambda b, t: (b, 0, 0))],
        out_shape=[jax.ShapeDtypeStruct((n, cin, cin), jnp.float32),
                   jax.ShapeDtypeStruct((n, cin, 1), jnp.float32)],
        compiler_params=pltpu.CompilerParams(
            dimension_semantics=("parallel", "arbitrary"),
            vmem_limit_bytes=vmem_limit),
        cost_estimate=pl.CostEstimate(
            flops=2 * cin * cin * n * hw_pad + n * cin * hw_pad,
            transcendentals=0,
            bytes_accessed=n * cin * hw_pad * 2 + n * (cin * cin + cin) * 4),
    )(x3)

    # ---- tiny per-channel math in plain JAX ----
    gram = jnp.sum(gram_part, axis=0)                    # (Cin, Cin)
    xsum = jnp.sum(sum_part, axis=0).reshape(cin)        # (Cin,)
    w32 = w_t.astype(jnp.float32)                        # (Cs2, Cin)
    col_sum = w32 @ xsum                                 # (Cs2,)
    col_sq = jnp.sum((w32 @ gram) * w32, axis=1)         # (Cs2,) = w_i^T G w_i
    ch_sum = col_sum.reshape(cout, s2).sum(axis=1)
    ch_sq = col_sq.reshape(cout, s2).sum(axis=1)
    count = jnp.float32(n * hw * s2)                     # true global N*Hout*Wout
    mean = ch_sum / count
    # TODO(synk): E[y^2]-mean^2 cancels catastrophically when var << mean^2;
    # switch to a mean-shifted Gram if BN accuracy ever becomes limiting.
    var = jnp.maximum(ch_sq / count - mean * mean, 0.0)
    inv = lax.rsqrt(var + eps)
    scale_c = gamma.astype(jnp.float32) * inv
    shift_c = beta.astype(jnp.float32) - mean * scale_c
    col_scale = jnp.repeat(scale_c, s2).reshape(cs2, 1)
    col_shift = jnp.repeat(shift_c, s2).reshape(cs2, 1)

    # ---- phase 2: recompute matmul, fused BN affine + activation ----
    kernel = functools.partial(_apply_kernel, activation=activation)
    y = pl.pallas_call(
        kernel,
        grid=grid,
        in_specs=[x_spec, w_spec,
                  pl.BlockSpec((cs2, 1), lambda b, t: (0, 0)),
                  pl.BlockSpec((cs2, 1), lambda b, t: (0, 0))],
        out_specs=pl.BlockSpec((1, cs2, thw), lambda b, t: (b, 0, t)),
        out_shape=jax.ShapeDtypeStruct((n, cs2, hw_pad), out_dtype),
        compiler_params=pltpu.CompilerParams(
            dimension_semantics=("parallel", "parallel"),
            vmem_limit_bytes=vmem_limit),
        cost_estimate=pl.CostEstimate(
            flops=2 * cs2 * cin * n * hw_pad + 2 * cs2 * n * hw_pad,
            transcendentals=(n * cs2 * hw_pad if activation == "sigmoid" else 0),
            bytes_accessed=(n * cin * hw_pad * 2 + cs2 * cin * 2 + 2 * cs2 * 4
                            + n * cs2 * hw_pad * out_bytes)),
    )(x3, w_t, col_scale, col_shift)

    if hw_pad != hw:
        y = y[:, :, :hw]
    if layout == "packed":
        return y

    # Pixel shuffle back to NCHW: (N, Cout*k*k, H*W) -> (N, Cout, H*k, W*k).
    # TODO(synk): this transpose is one extra HBM read+write of the largest
    # tensor; use layout="packed" when the consumer accepts it (an in-kernel
    # lane interleave is not robustly lowerable for arbitrary W/k).
    y = y.reshape(n, cout, k, k, h, w)
    y = jnp.transpose(y, (0, 1, 4, 2, 5, 3))
    return y.reshape(n, cout, h * k, w * k)


def _reference(x, conv_w, conv_b, gamma, beta, *, stride, eps=1e-5,
               activation="relu", matmul_dtype=_MATMUL_DTYPE):
    # Pure-JAX reference of the PyTorch forward (training-mode BatchNorm),
    # with the conv inputs cast to the kernel's matmul dtype.
    n, cin, h, w = x.shape
    _, cout, k, _ = conv_w.shape
    t = jnp.einsum("nihw,iokl->nohwkl",
                   x.astype(matmul_dtype), conv_w.astype(matmul_dtype),
                   preferred_element_type=jnp.float32)
    t = jnp.transpose(t, (0, 1, 2, 4, 3, 5)).reshape(n, cout, h * k, w * k)
    t = t + conv_b[None, :, None, None]
    mean = jnp.mean(t, axis=(0, 2, 3), keepdims=True)
    var = jnp.mean((t - mean) ** 2, axis=(0, 2, 3), keepdims=True)
    t = (t - mean) / jnp.sqrt(var + eps)
    t = t * gamma[None, :, None, None] + beta[None, :, None, None]
    return jax.nn.sigmoid(t) if activation == "sigmoid" else jnp.maximum(t, 0.0)


if __name__ == "__main__":
    key = jax.random.PRNGKey(0)
    k_x, k_w, k_b, k_g, k_be = jax.random.split(key, 5)

    N, Cin, H, W = 2, 4, 16, 16
    Cout, stride = 8, 2

    x = jax.random.normal(k_x, (N, Cin, H, W), dtype=jnp.float32)
    # ConvTranspose2d weight shape: (in_ch, out_ch, k, k)
    conv_w = 0.2 * jax.random.normal(k_w, (Cin, Cout, stride, stride),
                                     dtype=jnp.float32)
    conv_b = 0.1 * jax.random.normal(k_b, (Cout,), dtype=jnp.float32)
    gamma = 1.0 + 0.3 * jax.random.normal(k_g, (Cout,), dtype=jnp.float32)
    beta = 0.1 * jax.random.normal(k_be, (Cout,), dtype=jnp.float32)

    # ReLU variant (module default); bf16 output by default.
    out = decode_block(x, conv_w, conv_b, gamma, beta, stride=stride,
                       activation="relu")
    out = jax.block_until_ready(out)
    ref = _reference(x, conv_w, conv_b, gamma, beta, stride=stride,
                     activation="relu")
    assert out.shape == (N, Cout, H * stride, W * stride)
    err = float(jnp.max(jnp.abs(out.astype(jnp.float32) - ref)))
    assert jnp.allclose(out.astype(jnp.float32), ref, atol=2.5e-2, rtol=2.5e-2), err

    # Sigmoid variant (approx-reciprocal EUP path).
    out_s = decode_block(x, conv_w, conv_b, gamma, beta, stride=stride,
                         activation="sigmoid")
    out_s = jax.block_until_ready(out_s)
    ref_s = _reference(x, conv_w, conv_b, gamma, beta, stride=stride,
                       activation="sigmoid")
    err_s = float(jnp.max(jnp.abs(out_s.astype(jnp.float32) - ref_s)))
    assert jnp.allclose(out_s.astype(jnp.float32), ref_s, atol=2e-2, rtol=2e-2), err_s

    print("KERNEL_OK")
</pallas_src>

<mosaic_0001>
module attributes {stable_mosaic.version = 11 : i64} {
  func.func @_gram_kernel(%arg0: i32, %arg1: i32, %arg2: memref<1x4x256xbf16, #tpu.memory_space<vmem>>, %arg3: memref<1x4x4xf32, #tpu.memory_space<vmem>>, %arg4: memref<1x4x1xf32, #tpu.memory_space<vmem>>) attributes {dimension_semantics = [#tpu.dimension_semantics<parallel>, #tpu.dimension_semantics<arbitrary>], iteration_bounds = array<i64: 2, 1>, scalar_prefetch = 0 : i64, scratch_operands = 0 : i64, tpu.core_type = #tpu.core_type<tc>, window_params = [{transform_indices = @transform_0, window_bounds = array<i64: 1, 4, 256>}, {transform_indices = @transform_1, window_bounds = array<i64: 1, 4, 4>}, {transform_indices = @transform_2, window_bounds = array<i64: 1, 4, 1>}]} {
    %c0_i32 = arith.constant 0 : i32
    %0 = arith.cmpi eq, %arg1, %c0_i32 : i32
    %1 = arith.extui %0 : i1 to i32
    %c0_i32_0 = arith.constant 0 : i32
    %2 = arith.cmpi ne, %1, %c0_i32_0 : i32
    scf.if %2 {
      %cst_16 = arith.constant 0.000000e+00 : f32
      %21 = vector.broadcast %cst_16 : f32 to vector<1x4x4xf32>
      %c0_17 = arith.constant 0 : index
      %c0_18 = arith.constant 0 : index
      %c0_19 = arith.constant 0 : index
      %22 = vector.load %arg3[%c0_17, %c0_18, %c0_19] : memref<1x4x4xf32, #tpu.memory_space<vmem>>, vector<1x4x4xf32>
      tpu.vector_store %arg3[%c0_17, %c0_18, %c0_19], %21 {strides = array<i32>} : memref<1x4x4xf32, #tpu.memory_space<vmem>>, vector<1x4x4xf32>,
      %cst_20 = arith.constant 0.000000e+00 : f32
      %23 = vector.broadcast %cst_20 : f32 to vector<1x4x1xf32>
      %c0_21 = arith.constant 0 : index
      %c0_22 = arith.constant 0 : index
      %c0_23 = arith.constant 0 : index
      %24 = vector.load %arg4[%c0_21, %c0_22, %c0_23] : memref<1x4x1xf32, #tpu.memory_space<vmem>>, vector<1x4x1xf32>
      tpu.vector_store %arg4[%c0_21, %c0_22, %c0_23], %23 {strides = array<i32>} : memref<1x4x1xf32, #tpu.memory_space<vmem>>, vector<1x4x1xf32>,
    } else {
    }
    %c0 = arith.constant 0 : index
    %c0_1 = arith.constant 0 : index
    %c0_2 = arith.constant 0 : index
    %3 = vector.load %arg2[%c0, %c0_1, %c0_2] : memref<1x4x256xbf16, #tpu.memory_space<vmem>>, vector<1x4x256xbf16>
    %4 = vector.shape_cast %3 : vector<1x4x256xbf16> to vector<4x256xbf16>
    %cst = arith.constant dense<0.000000e+00> : vector<4x4xf32>
    %5 = tpu.matmul %4, %4, %cst {dimension_numbers = #tpu.dot_dimension_numbers<[1], [1], [0], [0], [0, 0, 1, 0], [], []>} : vector<4x256xbf16>, vector<4x256xbf16>, vector<4x4xf32> -> vector<4x4xf32>
    %6 = arith.extf %4 : vector<4x256xbf16> to vector<4x256xf32>
    %cst_3 = arith.constant dense<0.000000e+00> : vector<4xf32>
    %7 = vector.multi_reduction <add>, %6, %cst_3 [1] : vector<4x256xf32> to vector<4xf32>
    %8 = vector.shape_cast %7 : vector<4xf32> to vector<4x1xf32>
    %c0_4 = arith.constant 0 : index
    %c0_5 = arith.constant 0 : index
    %c0_6 = arith.constant 0 : index
    %9 = vector.load %arg3[%c0_4, %c0_5, %c0_6] : memref<1x4x4xf32, #tpu.memory_space<vmem>>, vector<1x4x4xf32>
    %10 = vector.shape_cast %9 : vector<1x4x4xf32> to vector<4x4xf32>
    %11 = arith.addf %10, %5 : vector<4x4xf32>
    %c0_7 = arith.constant 0 : index
    %c0_8 = arith.constant 0 : index
    %c0_9 = arith.constant 0 : index
    %12 = vector.load %arg3[%c0_7, %c0_8, %c0_9] : memref<1x4x4xf32, #tpu.memory_space<vmem>>, vector<1x4x4xf32>
    %13 = vector.shape_cast %12 : vector<1x4x4xf32> to vector<4x4xf32>
    %14 = vector.shape_cast %11 : vector<4x4xf32> to vector<1x4x4xf32>
    tpu.vector_store %arg3[%c0_7, %c0_8, %c0_9], %14 {strides = array<i32>} : memref<1x4x4xf32, #tpu.memory_space<vmem>>, vector<1x4x4xf32>,
    %c0_10 = arith.constant 0 : index
    %c0_11 = arith.constant 0 : index
    %c0_12 = arith.constant 0 : index
    %15 = vector.load %arg4[%c0_10, %c0_11, %c0_12] : memref<1x4x1xf32, #tpu.memory_space<vmem>>, vector<1x4x1xf32>
    %16 = vector.shape_cast %15 : vector<1x4x1xf32> to vector<4x1xf32>
    %17 = arith.addf %16, %8 : vector<4x1xf32>
    %c0_13 = arith.constant 0 : index
    %c0_14 = arith.constant 0 : index
    %c0_15 = arith.constant 0 : index
    %18 = vector.load %arg4[%c0_13, %c0_14, %c0_15] : memref<1x4x1xf32, #tpu.memory_space<vmem>>, vector<1x4x1xf32>
    %19 = vector.shape_cast %18 : vector<1x4x1xf32> to vector<4x1xf32>
    %20 = vector.shape_cast %17 : vector<4x1xf32> to vector<1x4x1xf32>
    tpu.vector_store %arg4[%c0_13, %c0_14, %c0_15], %20 {strides = array<i32>} : memref<1x4x1xf32, #tpu.memory_space<vmem>>, vector<1x4x1xf32>,
    return
  }
  func.func @transform_0(%arg0: i32, %arg1: i32) -> (i32, i32, i32) {
    %c0_i32 = arith.constant 0 : i32
    %c0_i32_0 = arith.constant 0 : i32
    return %arg0, %c0_i32, %arg1 : i32, i32, i32
  }
  func.func @transform_1(%arg0: i32, %arg1: i32) -> (i32, i32, i32) {
    %c0_i32 = arith.constant 0 : i32
    %c0_i32_0 = arith.constant 0 : i32
    %c0_i32_1 = arith.constant 0 : i32
    return %arg0, %c0_i32, %c0_i32_0 : i32, i32, i32
  }
  func.func @transform_2(%arg0: i32, %arg1: i32) -> (i32, i32, i32) {
    %c0_i32 = arith.constant 0 : i32
    %c0_i32_0 = arith.constant 0 : i32
    %c0_i32_1 = arith.constant 0 : i32
    return %arg0, %c0_i32, %c0_i32_0 : i32, i32, i32
  }
}

</mosaic_0001>

<llo_original>
// kernel: tpu_custom_call.1
$region0: #{tpu_custom_call.1}
  #allocation0 [shape = 'u32[]', space=smem, size = 0x4, offset = 0x4, fixed_abs, tag = 'smem constant byte address 0x4 - core index']
  #allocation1 [shape = 'u32[144,128]{1,0:T(1,128)}', space=vmem, size = 0x12000, scoped, tag = 'internal scratch']
  %s0 = inlined_call_operand.hbm [shape: bf16[2,4,256], index: 0, kind: input, shape index: {}]
  %s1 = inlined_call_operand.hbm [shape: f32[2,4,4], index: 1, kind: output, shape index: {0}]
  %s2 = inlined_call_operand.vmem [shape: f32[2,4,1], index: 2, kind: output, shape index: {1}]
  %3 = xla_tuple %s1, %s2
  %s4 = sld [smem:[#allocation0]]
  $region53: #{tpu_custom_call.1} parent=0
    _
  %s6 = ssub.s32 1, %s4
  %s7 = scalar_select 0, %s6, %s4
  $region1: #{tpu_custom_call.1} parent=0
    #allocation2 [shape = 'u8[4096]{0}', space=vmem, size = 0x1000, scoped, tag = 'input window, operand 0']
    #allocation3 [shape = 's32[2]{0}', space=sflag, size = 0x8, scoped, tag = 'scoped memory for tpu_custom_call.1']
    #allocation4 [shape = 's32[2]{0}', space=sflag, size = 0x8, scoped, tag = 'scoped memory for tpu_custom_call.1']
    #allocation5 [shape = 'u8[4096]{0}', space=vmem, size = 0x1000, scoped, tag = 'output window, operand 0']
    %8 = vsyncpa [#allocation3], 0
    %s9 = scalar_lea.sflag [#allocation3], 1
    %10 = vsyncpa %s9, 0
    %11 = vsyncpa [#allocation4], 0
    %s12 = scalar_lea.sflag [#allocation4], 1
    %13 = vsyncpa %s12, 0
    loop: start=0, step=1, limit=4
    $region2: #{tpu_custom_call.1} parent=1 // loop_pre_header
      _
    $region3: #{tpu_custom_call.1} parent=1 // loop_header
      %s15 = sphi 0, %s19
      %p16 = scmp.ge.s32.totalorder %s15, 4
      %s22 = sphi 0, %s34
      %s23 = sphi 0, %s30
      %s24 = sphi 0, %s22
      %s25 = sphi 0, %s23
      %s26 = sphi 0, %s24
      %s27 = sphi 0, %s25
      %s39 = sphi 0, %s41
      %s42 = sphi 0, %s39
      %s43 = sphi 0, %s42
      %s59 = sphi 0, %s43
      %s65 = sphi 0, %s67
      %s68 = sphi 0, %s65
      %s69 = sphi 0, %s68
      %s85 = sphi 0, %s69
      %s91 = sphi 0, %s93
      %s94 = sphi 0, %s91
      %s95 = sphi 0, %s94
      %s111 = sphi 0, %s95
    $region4: #{tpu_custom_call.1} parent=1 // loop_header_branch
      %18 = sbr.rel (%p16) target = $region8
    $region5: #{tpu_custom_call.1} parent=1 // loop_body
      %s20 = ssub.s32 %s15, 1
      %s21 = ssub.s32 %s15, 2
      %s28 = sadd.s32 1, %s23
      %p29 = scmp.ge.s32.totalorder %s28, 1
      %s30 = scalar_select %p29, 0, %s28
      %s31 = sadd.s32 1, %s22
      %s32 = scalar_select %p29, %s31, %s22
      %p33 = scmp.ge.s32.totalorder %s32, 2
      %s34 = scalar_select %p33, 0, %s32
      %s35 = ssub.s32 %s22, %s34
      %s36 = ssub.s32 %s23, %s30
      %s37 = sor.u32 %s35, %s36
      %p38 = scmp.eq.s32.totalorder %s37, 0
      %s40 = sadd.s32 %s39, 1
      %s41 = scalar_select %p38, %s39, %s40
      %p44 = pneg %p38
      %p45 = scmp.eq.s32.totalorder %s15, 1
      %p46 = por %p44, %p45
      %p47 = scmp.ne.s32.totalorder %s39, %s42
      %p48 = scmp.eq.s32.totalorder %s15, 0
      %p49 = por %p47, %p48
      %p50 = scmp.ne.s32.totalorder %s39, %s42
      %p51 = scmp.eq.s32.totalorder %s20, 1
      %p52 = por %p50, %p51
      %p53 = scmp.ne.s32.totalorder %s42, %s43
      %p54 = scmp.eq.s32.totalorder %s20, 0
      %p55 = por %p53, %p54
      %p56 = scmp.ne.s32.totalorder %s42, %s43
      %p57 = scmp.eq.s32.totalorder %s21, 1
      %p58 = por %p56, %p57
      %p60 = scmp.ne.s32.totalorder %s43, %s59
      %p61 = scmp.eq.s32.totalorder %s21, 0
      %p62 = por %p60, %p61
      %s63 = ssub.s32 %s22, %s34
      %p64 = scmp.eq.s32.totalorder %s63, 0
      %s66 = sadd.s32 %s65, 1
      %s67 = scalar_select %p64, %s65, %s66
      %p70 = pneg %p64
      %p71 = scmp.eq.s32.totalorder %s15, 1
      %p72 = por %p70, %p71
      %p73 = scmp.ne.s32.totalorder %s65, %s68
      %p74 = scmp.eq.s32.totalorder %s15, 0
      %p75 = por %p73, %p74
      %p76 = scmp.ne.s32.totalorder %s65, %s68
      %p77 = scmp.eq.s32.totalorder %s20, 1
      %p78 = por %p76, %p77
      %p79 = scmp.ne.s32.totalorder %s68, %s69
      %p80 = scmp.eq.s32.totalorder %s20, 0
      %p81 = por %p79, %p80
      %p82 = scmp.ne.s32.totalorder %s68, %s69
      %p83 = scmp.eq.s32.totalorder %s21, 1
      %p84 = por %p82, %p83
      %p86 = scmp.ne.s32.totalorder %s69, %s85
      %p87 = scmp.eq.s32.totalorder %s21, 0
      %p88 = por %p86, %p87
      %s89 = ssub.s32 %s22, %s34
      %p90 = scmp.eq.s32.totalorder %s89, 0
      %s92 = sadd.s32 %s91, 1
      %s93 = scalar_select %p90, %s91, %s92
      %p96 = pneg %p90
      %p97 = scmp.eq.s32.totalorder %s15, 1
      %p98 = por %p96, %p97
      %p99 = scmp.ne.s32.totalorder %s91, %s94
      %p100 = scmp.eq.s32.totalorder %s15, 0
      %p101 = por %p99, %p100
      %p102 = scmp.ne.s32.totalorder %s91, %s94
      %p103 = scmp.eq.s32.totalorder %s20, 1
      %p104 = por %p102, %p103
      %p105 = scmp.ne.s32.totalorder %s94, %s95
      %p106 = scmp.eq.s32.totalorder %s20, 0
      %p107 = por %p105, %p106
      %p108 = scmp.ne.s32.totalorder %s94, %s95
      %p109 = scmp.eq.s32.totalorder %s21, 1
      %p110 = por %p108, %p109
      %p112 = scmp.ne.s32.totalorder %s95, %s111
      %p113 = scmp.eq.s32.totalorder %s21, 0
      %p114 = por %p112, %p113
      %p115 = scmp.le.s32.totalorder 1, %s15
      %p116 = scmp.lt.s32.totalorder %s15, 3
      %p117 = pnand %p115, %p116
      %p118 = pneg %p117
      // Predicated region
      $region9: #{tpu_custom_call.1} parent=5 // pred_check
        _
      $region10: #{tpu_custom_call.1} parent=5 // pred_check_branch
        %120 = sbr.rel (%p117) target = $region12
      $region11: #{tpu_custom_call.1} parent=5 // pred_region
        %s121 = ssub.s32 %s15, 1
      $region12: #{tpu_custom_call.1} parent=5 // pred_fallthru
        _
      %p122 = scmp.lt.s32.totalorder %s15, 2
      // Predicated region
      $region13: #{tpu_custom_call.1} parent=5 // pred_check
        %p123 = pneg %p122
      $region14: #{tpu_custom_call.1} parent=5 // pred_check_branch
        %125 = sbr.rel (%p123) target = $region16
      $region15: #{tpu_custom_call.1} parent=5 // pred_region
        // Predicated region
        $region17: #{tpu_custom_call.1} parent=15 // pred_check
          %p126 = pneg %p49
        $region18: #{tpu_custom_call.1} parent=15 // pred_check_branch
          %128 = sbr.rel (%p126) target = $region20
        $region19: #{tpu_custom_call.1} parent=15 // pred_region
          %s129 = sand.u32 %s39, 1
          %s130 = scalar_lea.sflag [#allocation3], %s129
          %s131 = sand.u32 %s39, 1
          %s132 = smul.addr %s131, 4
          %s133 = scalar_lea.vmem [#allocation2], %s132
          %s134 = smul.u32 2, %s23
          %s136 = ssub.s32 64, 64
          %137 = vsyncadd %s130, %s136
          %s138 = smul.addr %s22, 2
          %s139 = sadd.s32 %s134, %s138
          %s140 = smul.addr %s139, 32
          %s141 = scalar_lea.hbm %s0, %s140
          %s143 = sshll.u32 %s133, 4
          %s144 = int_to_ptr.vmem [resolvable:$true] %s143
          %146 = dma.hbm_to_vmem [thread:$0]  %s141, 64, %s144, %s130
        $region20: #{tpu_custom_call.1} parent=15 // pred_fallthru
          _
      $region16: #{tpu_custom_call.1} parent=5 // pred_fallthru
        _
      %p147 = scmp.le.s32.totalorder 1, %s15
      %p148 = scmp.lt.s32.totalorder %s15, 3
      %p149 = pnand %p147, %p148
      %p150 = pneg %p149
      // Predicated region
      $region21: #{tpu_custom_call.1} parent=5 // pred_check
        _
      $region22: #{tpu_custom_call.1} parent=5 // pred_check_branch
        %152 = sbr.rel (%p149) target = $region24
      $region23: #{tpu_custom_call.1} parent=5 // pred_region
        %s153 = ssub.s32 %s15, 1
        %s154 = sand.u32 %s42, 1
        %s155 = scalar_lea.sflag [#allocation3], %s154
        %s156 = sand.u32 %s42, 1
        %s157 = smul.addr %s156, 4
        %s158 = scalar_lea.vmem [#allocation2], %s157
        // Predicated region
        $region25: #{tpu_custom_call.1} parent=23 // pred_check
          %p159 = pneg %p55
        $region26: #{tpu_custom_call.1} parent=23 // pred_check_branch
          %161 = sbr.rel (%p159) target = $region28
        $region27: #{tpu_custom_call.1} parent=23 // pred_region
          %162 = dma.done %s155, 64
        $region28: #{tpu_custom_call.1} parent=23 // pred_fallthru
          _
        %s163 = sand.u32 %s42, 1
        %s164 = scalar_lea.sflag [#allocation3], %s163
        %s165 = sand.u32 %s42, 1
        %s166 = smul.addr %s165, 4
        %s167 = scalar_lea.vmem [#allocation2], %s166
        %p168 = pneg %p55
        %p169 = pneg %p52
        %p170 = pneg %p81
        %p171 = pneg %p78
        %s172 = sand.u32 %s68, 1
        %s173 = scalar_lea.sflag [#allocation4], %s172
        %s174 = sand.u32 %s68, 1
        %s175 = smul.addr %s174, 4
        %s176 = scalar_lea.vmem [#allocation5], %s175
        %p177 = pneg %p107
        %p178 = pneg %p104
        %p179 = scmp.lt.s32.totalorder %s24, 1
        %s180 = scalar_select %p179, %s24, 1
        %s181 = smul.addr %s180, 4
        %s182 = scalar_lea.vmem %s2, %s181
        %s183 = smul.u32 2, %s25
        %p184 = scmp.lt.s32.totalorder %s24, 1
        %s185 = scalar_select %p184, %s24, 1
        %s186 = smul.addr %s185, 4
        %s187 = scalar_lea.vmem %s2, %s186
        %p189 = scmp.eq.s32.totalorder %s25, 0
        // Predicated region
        $region29: #{tpu_custom_call.1} parent=23 // pred_check
          %p190 = pneg %p189
        $region30: #{tpu_custom_call.1} parent=23 // pred_check_branch
          %192 = sbr.rel (%p190) target = $region32
        $region31: #{tpu_custom_call.1} parent=23 // pred_region
          %vm193 = vcmask 27648
          %194 = vst.msk [vmem:[%s176] sm:$0xf] %vm193, 0.0
          %vm195 = vcmask 3072
          %196 = vst.msk [vmem:[%s187] sm:$0xf] %vm195, 0.0
        $region32: #{tpu_custom_call.1} parent=23 // pred_fallthru
          _
        %v197 = vld [vmem:[%s158] sm:$0xf]
        %v200 = vunpack.c.l.s4 1983009808
        %v201 = vunpack.c.0.s8 %v200
        %v202 = vlaneseq
        %v203 = vshrl.u32 %v202, 7
        %v204 = vsub.s32 %v201, %v203
        %v205 = vrot.slane %v197, %v204
        %v206 = vcombine.high %v205, %v205
        %209 = vmatprep.subr.bf16.mxu0 %v206
        %210 = vmatpush1.bf16.xpose.msra.mxu0 %v205
        %211 = vmatprep.subr.bf16.mxu0 0
        %212 = vmatpush1.bf16.xpose.msra.mxu0 0
        %213 = vmatprep.subr.bf16.mxu0 0
        %214 = vmatpush1.bf16.xpose.msra.mxu0 0
        %215 = vmatprep.subr.bf16.mxu0 0
        %216 = vmatpush1.bf16.xpose.msra.mxu0 0
        %217 = vmatprep.subr.bf16.mxu0 0
        %218 = vmatpush1.bf16.xpose.msra.mxu0 0
        %219 = vmatprep.subr.bf16.mxu0 0
        %220 = vmatpush1.bf16.xpose.msra.mxu0 0
        %221 = vmatprep.subr.bf16.mxu0 0
        %222 = vmatpush1.bf16.xpose.msra.mxu0 0
        %223 = vmatprep.subr.bf16.mxu0 0
        %224 = vmatpush1.bf16.xpose.msra.mxu0 0
        %225 = vmatprep.subr.bf16.mxu0 0
        %226 = vmatpush1.bf16.xpose.msra.mxu0 0
        %227 = vmatprep.subr.bf16.mxu0 0
        %228 = vmatpush1.bf16.xpose.msra.mxu0 0
        %229 = vmatprep.subr.bf16.mxu0 0
        %230 = vmatpush1.bf16.xpose.msra.mxu0 0
        %231 = vmatprep.subr.bf16.mxu0 0
        %232 = vmatpush1.bf16.xpose.msra.mxu0 0
        %233 = vmatprep.subr.bf16.mxu0 0
        %234 = vmatpush1.bf16.xpose.msra.mxu0 0
        %235 = vmatprep.subr.bf16.mxu0 0
        %236 = vmatpush1.bf16.xpose.msra.mxu0 0
        %237 = vmatprep.subr.bf16.mxu0 0
        %238 = vmatpush1.bf16.xpose.msra.mxu0 0
        %239 = vmatprep.subr.bf16.mxu0 0
        %240 = vmatpush1.bf16.xpose.msra.mxu0 0
        %241 = vmatprep.mubr.bf16.mxu0 %v206
        %242 = vmatmul.mubr.bf16.gmra.mrb[0].mxu0 %v205
        %v243 = vpop.f32.mrb[0].mxu0
        %v244 = vadd.f32 0.0, %v243
        %v245 = vpop.f32.mrb[0].mxu0
        %v246 = vpop.f32.mrb[0].mxu0
        %v247 = vpop.f32.mrb[0].mxu0
        %248 = vdwg.mxu0
        %v249 = vunpack.c.l.bf16 %v197
        %v251 = vcombine.high %v249, %v249
        %vm253 = vcmask 1043456
        %v254 = vsel %vm253, %v249, 0.0
        %v255 = vsel %vm253, %v251, 0.0
        %v256 = vadd.f32 %v254, %v255
        %257 = vadd.xlane.f32.xlu0 %v256
        %v258 = vpop.xlane.xlu0 %257
        %v259 = vld [vmem:[%s176] sm:$0xf]
        %v260 = vadd.f32 %v259, %v244
        %vm261 = vcmask 27648
        %262 = vst.msk [vmem:[%s176] sm:$0xf] %vm261, %v260
        %v263 = vld [vmem:[%s187] sm:$0xf]
        %v264 = vadd.f32 %v263, %v258
        %vm265 = vcmask 3072
        %266 = vst.msk [vmem:[%s187] sm:$0xf] %vm265, %v264
        %s267 = sand.u32 %s68, 1
        %s268 = scalar_lea.sflag [#allocation4], %s267
        %s269 = sand.u32 %s68, 1
        %s270 = smul.addr %s269, 4
        %s271 = scalar_lea.vmem [#allocation5], %s270
        %p272 = scmp.lt.s32.totalorder %s24, 1
        %s273 = scalar_select %p272, %s24, 1
        %s274 = smul.addr %s273, 4
        %s275 = scalar_lea.vmem %s2, %s274
        // Predicated region
        $region33: #{tpu_custom_call.1} parent=23 // pred_check
          %p276 = pneg %p78
        $region34: #{tpu_custom_call.1} parent=23 // pred_check_branch
          %278 = sbr.rel (%p276) target = $region36
        $region35: #{tpu_custom_call.1} parent=23 // pred_region
          %s280 = ssub.s32 64, 64
          %281 = vsyncadd %s268, %s280
          %s282 = smul.addr %s24, 64
          %s283 = scalar_lea.hbm %s1, %s282
          %s285 = sshll.u32 %s271, 4
          %s286 = int_to_ptr.vmem [resolvable:$true] %s285
          %288 = dma.vmem_to_hbm [thread:$0]  %s286, 64, %s283, %s268
        $region36: #{tpu_custom_call.1} parent=23 // pred_fallthru
          _
        // Predicated region
        $region37: #{tpu_custom_call.1} parent=23 // pred_check
          %p289 = pneg %p104
        $region38: #{tpu_custom_call.1} parent=23 // pred_check_branch
          %291 = sbr.rel (%p289) target = $region40
        $region39: #{tpu_custom_call.1} parent=23 // pred_region
          _
        $region40: #{tpu_custom_call.1} parent=23 // pred_fallthru
          _
      $region24: #{tpu_custom_call.1} parent=5 // pred_fallthru
        _
      %p292 = scmp.le.s32.totalorder 2, %s15
      // Predicated region
      $region41: #{tpu_custom_call.1} parent=5 // pred_check
        %p293 = pneg %p292
      $region42: #{tpu_custom_call.1} parent=5 // pred_check_branch
        %295 = sbr.rel (%p293) target = $region44
      $region43: #{tpu_custom_call.1} parent=5 // pred_region
        %s296 = ssub.s32 %s15, 2
        // Predicated region
        $region45: #{tpu_custom_call.1} parent=43 // pred_check
          %p297 = pneg %p84
        $region46: #{tpu_custom_call.1} parent=43 // pred_check_branch
          %299 = sbr.rel (%p297) target = $region48
        $region47: #{tpu_custom_call.1} parent=43 // pred_region
          %s300 = sand.u32 %s69, 1
          %s301 = scalar_lea.sflag [#allocation4], %s300
          %s302 = sand.u32 %s69, 1
          %s303 = smul.addr %s302, 4
          %s304 = scalar_lea.vmem [#allocation5], %s303
          %305 = dma.done %s301, 64
        $region48: #{tpu_custom_call.1} parent=43 // pred_fallthru
          _
        // Predicated region
        $region49: #{tpu_custom_call.1} parent=43 // pred_check
          %p306 = pneg %p110
        $region50: #{tpu_custom_call.1} parent=43 // pred_check_branch
          %308 = sbr.rel (%p306) target = $region52
        $region51: #{tpu_custom_call.1} parent=43 // pred_region
          %p309 = scmp.lt.s32.totalorder %s26, 1
          %s310 = scalar_select %p309, %s26, 1
          %s311 = smul.addr %s310, 4
          %s312 = scalar_lea.vmem %s2, %s311
        $region52: #{tpu_custom_call.1} parent=43 // pred_fallthru
          _
      $region44: #{tpu_custom_call.1} parent=5 // pred_fallthru
        _
    $region6: #{tpu_custom_call.1} parent=1 // loop_footer
      %s19 = sadd.s32 1, %s15
    $region7: #{tpu_custom_call.1} parent=1 // loop_footer_branch
      %14 = sbr.rel target = $region3
    $region8: #{tpu_custom_call.1} parent=1 // loop_exit
      _
    %313 = vsyncpa [#allocation3], 1
    %s314 = scalar_lea.sflag [#allocation3], 1
    %315 = vsyncpa %s314, 1
    %316 = vsyncpa [#allocation4], 1
    %s317 = scalar_lea.sflag [#allocation4], 1
    %318 = vsyncpa %s317, 1

</llo_original>
